<compile_context>
chip_gen: v6e
topology: v6e:2x2x1
jax: 0.10.0
libtpu: 0.0.40
codegen_flags: <defaults>
</compile_context>

<pallas_src>
import jax
import jax.numpy as jnp
from jax import lax
from jax.experimental import pallas as pl
from jax.experimental.pallas import tpu as pltpu

HIDDEN = 256
OUT = 4


def emb2seq_kernel(x_ref, w1_ref, b1_ref, w2t_ref, b2_ref, o_ref):
    # x_ref  : [TM, D]   f32      w1_ref : [D, 256]    bf16
    # b1_ref : [1, 256]  f32      w2t_ref: [4, 256]    bf16 (= w2.T)
    # b2_ref : [4, 1]    f32      o_ref  : [4, TM]     (input dtype)
    x = x_ref[...].astype(jnp.bfloat16)
    # fc_1: bf16 operands, f32 accumulation on the MXU.
    h = jnp.dot(x, w1_ref[...], preferred_element_type=jnp.float32)   # [TM, 256]
    h = jnp.maximum(h + b1_ref[...], 0.0)                              # bias + relu, f32 VPU
    # TODO(synk): training-mode dropout omitted (inference semantics: identity)

    # fc_2 as an NT matmul: both operands contract on dim 1 (flash-attn q@k^T
    # pattern), producing [OUT, TM] so the store is lane-dense (M on the
    # 128-lane axis) with no XLU transpose of the [TM, 256] hidden tile.
    y_t = lax.dot_general(
        w2t_ref[...], h.astype(jnp.bfloat16),
        dimension_numbers=(((1,), (1,)), ((), ())),
        preferred_element_type=jnp.float32,
    )                                                                   # [4, TM]
    o_ref[...] = (y_t + b2_ref[...]).astype(o_ref.dtype)


def _choose_tm(M, target=8192):
    """Row tile for the M axis.

    * multiple of 512 -> the [OUT, TM] output block stays 128-lane aligned
      (unmasked vst) and the x block's sublane dim is 8-aligned,
    * large enough to amortize the ~0.35 us per-grid-step overhead,
    * small enough that the ~2.5 KiB/row VMEM working set fits and the grid
      has >= 4 steps for megacore sharding when M is large,
    * tiny M collapses to one full-extent block (block dims == array dims).
    """
    if M <= 1024:
        return M
    tm = min(target, M)
    while tm > 2048 and -(-M // tm) < 4:   # prefer >= 4 grid steps (v7x 2 TCs)
        tm //= 2
    return max(512, (tm // 512) * 512)


def emb2seq_forward(seq, w1, b1, w2, b2):
    """seq: [B, S, D]; w1: [D, 256]; b1: [256]; w2: [256, 4]; b2: [4]."""
    B, S, D = seq.shape
    M = B * S
    x2d = seq.reshape(M, D)

    # One-time parameter prep (tiny): bf16 matmul operands, f32 biases.
    w1_bf = w1.astype(jnp.bfloat16)                  # [D, HIDDEN]
    w2t_bf = w2.T.astype(jnp.bfloat16)               # [OUT, HIDDEN]
    b1_2d = b1.reshape(1, HIDDEN).astype(jnp.float32)
    b2_2d = b2.reshape(OUT, 1).astype(jnp.float32)   # broadcast over lanes

    TM = _choose_tm(M)
    grid = (pl.cdiv(M, TM),)

    cost = pl.CostEstimate(
        flops=2 * M * (D * HIDDEN + HIDDEN * OUT),
        transcendentals=0,
        bytes_accessed=(M * (D + OUT) * 4
                        + (D * HIDDEN + HIDDEN * OUT) * 2
                        + (HIDDEN + OUT) * 4),
    )

    cp_kwargs = dict(dimension_semantics=("parallel",))
    if TM > 2048:
        # Big tiles need more than the default scoped-VMEM (16/32 MiB);
        # actual usage at TM=8192 is ~24 MiB, well under v7x's 64 MiB physical.
        cp_kwargs["vmem_limit_bytes"] = 64 * 1024 * 1024

    # Lane-dense output: [OUT, M]; transposed back to [B, S, OUT] below.
    out_t = pl.pallas_call(
        emb2seq_kernel,
        out_shape=jax.ShapeDtypeStruct((OUT, M), seq.dtype),
        grid=grid,
        in_specs=[
            pl.BlockSpec((TM, D), lambda i: (i, 0)),            # x tile (streamed)
            pl.BlockSpec((D, HIDDEN), lambda i: (0, 0)),        # w1   (resident)
            pl.BlockSpec((1, HIDDEN), lambda i: (0, 0)),        # b1   (resident)
            pl.BlockSpec((OUT, HIDDEN), lambda i: (0, 0)),      # w2^T (resident)
            pl.BlockSpec((OUT, 1), lambda i: (0, 0)),           # b2   (resident)
        ],
        out_specs=pl.BlockSpec((OUT, TM), lambda i: (0, i)),
        compiler_params=pltpu.CompilerParams(**cp_kwargs),
        cost_estimate=cost,
    )(x2d, w1_bf, b1_2d, w2t_bf, b2_2d)

    # Required by the module's return layout: [OUT, M] -> [M, OUT] -> [B, S, OUT].
    return out_t.T.reshape(B, S, OUT)


def _ref_forward(seq, w1, b1, w2, b2):
    h = jnp.maximum(seq @ w1 + b1, 0.0)
    return h @ w2 + b2


if __name__ == "__main__":
    # Small shapes consistent with the module: batch=2, seq=8, input_dim=32.
    B, S, D = 2, 8, 32
    key = jax.random.PRNGKey(0)
    k_x, k_w1, k_b1, k_w2, k_b2, k_x2 = jax.random.split(key, 6)

    seq = jax.random.normal(k_x, (B, S, D), dtype=jnp.float32)
    # Deterministic synthetic parameters (shapes from the nn.Linear definitions,
    # stored as [in, out] = PyTorch weight.T so the kernel does x @ W + b).
    w1 = jax.random.normal(k_w1, (D, HIDDEN), dtype=jnp.float32) * 0.05
    b1 = jax.random.normal(k_b1, (HIDDEN,), dtype=jnp.float32) * 0.05
    w2 = jax.random.normal(k_w2, (HIDDEN, OUT), dtype=jnp.float32) * 0.05
    b2 = jax.random.normal(k_b2, (OUT,), dtype=jnp.float32) * 0.05

    out = jax.block_until_ready(emb2seq_forward(seq, w1, b1, w2, b2))
    ref = _ref_forward(seq, w1, b1, w2, b2)
    assert out.shape == (B, S, OUT), out.shape
    # bf16 matmul operands with f32 accumulation -> ~1e-3 error vs f32 ref.
    assert jnp.allclose(out, ref, atol=1e-2, rtol=1e-2), "mismatch vs reference"

    # Second check: exercise the multi-step tiled path (grid > 1, partial last block).
    B2, S2 = 3, 736                      # M = 2208 -> TM = 1024, grid = 3
    seq2 = jax.random.normal(k_x2, (B2, S2, D), dtype=jnp.float32)
    out2 = jax.block_until_ready(emb2seq_forward(seq2, w1, b1, w2, b2))
    ref2 = _ref_forward(seq2, w1, b1, w2, b2)
    assert out2.shape == (B2, S2, OUT), out2.shape
    assert jnp.allclose(out2, ref2, atol=1e-2, rtol=1e-2), "mismatch vs reference (tiled)"

    print("KERNEL_OK")
</pallas_src>

<mosaic_0001>
module attributes {stable_mosaic.version = 11 : i64} {
  func.func @emb2seq_kernel(%arg0: i32, %arg1: memref<16x32xf32, #tpu.memory_space<vmem>>, %arg2: memref<32x256xbf16, #tpu.memory_space<vmem>>, %arg3: memref<1x256xf32, #tpu.memory_space<vmem>>, %arg4: memref<4x256xbf16, #tpu.memory_space<vmem>>, %arg5: memref<4x1xf32, #tpu.memory_space<vmem>>, %arg6: memref<4x16xf32, #tpu.memory_space<vmem>>) attributes {dimension_semantics = [#tpu.dimension_semantics<parallel>], iteration_bounds = array<i64: 1>, scalar_prefetch = 0 : i64, scratch_operands = 0 : i64, tpu.core_type = #tpu.core_type<tc>, window_params = [{transform_indices = @transform_0, window_bounds = array<i64: 16, 32>}, {pipeline_mode = #tpu.pipeline_mode<synchronous>, transform_indices = @transform_1, window_bounds = array<i64: 32, 256>}, {pipeline_mode = #tpu.pipeline_mode<synchronous>, transform_indices = @transform_2, window_bounds = array<i64: 1, 256>}, {pipeline_mode = #tpu.pipeline_mode<synchronous>, transform_indices = @transform_3, window_bounds = array<i64: 4, 256>}, {pipeline_mode = #tpu.pipeline_mode<synchronous>, transform_indices = @transform_4, window_bounds = array<i64: 4, 1>}, {transform_indices = @transform_5, window_bounds = array<i64: 4, 16>}]} {
    %c0 = arith.constant 0 : index
    %c0_0 = arith.constant 0 : index
    %0 = vector.load %arg1[%c0, %c0_0] : memref<16x32xf32, #tpu.memory_space<vmem>>, vector<16x32xf32>
    %1 = arith.truncf %0 : vector<16x32xf32> to vector<16x32xbf16>
    %c0_1 = arith.constant 0 : index
    %c0_2 = arith.constant 0 : index
    %2 = vector.load %arg2[%c0_1, %c0_2] : memref<32x256xbf16, #tpu.memory_space<vmem>>, vector<32x256xbf16>
    %cst = arith.constant dense<0.000000e+00> : vector<16x256xf32>
    %3 = tpu.matmul %1, %2, %cst {dimension_numbers = #tpu.dot_dimension_numbers<[1], [0], [0], [1], [0, 0, 1, 1], [], []>} : vector<16x32xbf16>, vector<32x256xbf16>, vector<16x256xf32> -> vector<16x256xf32>
    %c0_3 = arith.constant 0 : index
    %c0_4 = arith.constant 0 : index
    %4 = vector.load %arg3[%c0_3, %c0_4] : memref<1x256xf32, #tpu.memory_space<vmem>>, vector<1x256xf32>
    %5 = vector.broadcast %4 : vector<1x256xf32> to vector<16x256xf32>
    %6 = arith.addf %3, %5 : vector<16x256xf32>
    %cst_5 = arith.constant 0.000000e+00 : f32
    %7 = vector.broadcast %cst_5 : f32 to vector<16x256xf32>
    %8 = arith.maximumf %6, %7 : vector<16x256xf32>
    %c0_6 = arith.constant 0 : index
    %c0_7 = arith.constant 0 : index
    %9 = vector.load %arg4[%c0_6, %c0_7] : memref<4x256xbf16, #tpu.memory_space<vmem>>, vector<4x256xbf16>
    %10 = arith.truncf %8 : vector<16x256xf32> to vector<16x256xbf16>
    %cst_8 = arith.constant dense<0.000000e+00> : vector<4x16xf32>
    %11 = tpu.matmul %9, %10, %cst_8 {dimension_numbers = #tpu.dot_dimension_numbers<[1], [1], [0], [0], [0, 0, 1, 0], [], []>} : vector<4x256xbf16>, vector<16x256xbf16>, vector<4x16xf32> -> vector<4x16xf32>
    %c0_9 = arith.constant 0 : index
    %c0_10 = arith.constant 0 : index
    %12 = vector.load %arg5[%c0_9, %c0_10] : memref<4x1xf32, #tpu.memory_space<vmem>>, vector<4x1xf32>
    %13 = vector.broadcast %12 : vector<4x1xf32> to vector<4x16xf32>
    %14 = arith.addf %11, %13 : vector<4x16xf32>
    %c0_11 = arith.constant 0 : index
    %c0_12 = arith.constant 0 : index
    %15 = vector.load %arg6[%c0_11, %c0_12] : memref<4x16xf32, #tpu.memory_space<vmem>>, vector<4x16xf32>
    tpu.vector_store %arg6[%c0_11, %c0_12], %14 {strides = array<i32>} : memref<4x16xf32, #tpu.memory_space<vmem>>, vector<4x16xf32>,
    return
  }
  func.func @transform_0(%arg0: i32) -> (i32, i32) {
    %c0_i32 = arith.constant 0 : i32
    %c0_i32_0 = arith.constant 0 : i32
    return %arg0, %c0_i32 : i32, i32
  }
  func.func @transform_1(%arg0: i32) -> (i32, i32) {
    %c0_i32 = arith.constant 0 : i32
    %c0_i32_0 = arith.constant 0 : i32
    %c0_i32_1 = arith.constant 0 : i32
    return %c0_i32, %c0_i32_0 : i32, i32
  }
  func.func @transform_2(%arg0: i32) -> (i32, i32) {
    %c0_i32 = arith.constant 0 : i32
    %c0_i32_0 = arith.constant 0 : i32
    %c0_i32_1 = arith.constant 0 : i32
    return %c0_i32, %c0_i32_0 : i32, i32
  }
  func.func @transform_3(%arg0: i32) -> (i32, i32) {
    %c0_i32 = arith.constant 0 : i32
    %c0_i32_0 = arith.constant 0 : i32
    %c0_i32_1 = arith.constant 0 : i32
    return %c0_i32, %c0_i32_0 : i32, i32
  }
  func.func @transform_4(%arg0: i32) -> (i32, i32) {
    %c0_i32 = arith.constant 0 : i32
    %c0_i32_0 = arith.constant 0 : i32
    %c0_i32_1 = arith.constant 0 : i32
    return %c0_i32, %c0_i32_0 : i32, i32
  }
  func.func @transform_5(%arg0: i32) -> (i32, i32) {
    %c0_i32 = arith.constant 0 : i32
    %c0_i32_0 = arith.constant 0 : i32
    return %c0_i32, %arg0 : i32, i32
  }
}

</mosaic_0001>

<llo_original>
// kernel: tpu_custom_call.1
$region0: #{tpu_custom_call.1}
  #allocation0 [shape = 'u32[]', space=smem, size = 0x4, offset = 0x4, fixed_abs, tag = 'smem constant byte address 0x4 - core index']
  #allocation1 [shape = 'u32[144,128]{1,0:T(1,128)}', space=vmem, size = 0x12000, scoped, tag = 'internal scratch']
  %s0 = inlined_call_operand.hbm [shape: f32[16,32], index: 0, kind: input, shape index: {}]
  %s1 = inlined_call_operand.hbm [shape: bf16[32,256], index: 1, kind: input, shape index: {}]
  %s2 = inlined_call_operand.vmem [shape: f32[1,256], index: 2, kind: input, shape index: {}]
  %s3 = inlined_call_operand.vmem [shape: bf16[4,256], index: 3, kind: input, shape index: {}]
  %s4 = inlined_call_operand.vmem [shape: f32[4,1], index: 4, kind: input, shape index: {}]
  %s5 = inlined_call_operand.hbm [shape: f32[4,16], index: 5, kind: output, shape index: {}]
  %s6 = sld [smem:[#allocation0]]
  $region38: #{tpu_custom_call.1} parent=0
    _
  %s8 = ssub.s32 1, %s6
  %s9 = scalar_select 0, %s8, %s6
  $region1: #{tpu_custom_call.1} parent=0
    #allocation2 [shape = 'u8[8192]{0}', space=vmem, size = 0x2000, scoped, tag = 'input window, operand 0, single buffered']
    #allocation3 [shape = 's32[1]{0}', space=sflag, size = 0x4, scoped, tag = 'scoped memory for tpu_custom_call.1']
    #allocation4 [shape = 's32[1]{0}', space=sflag, size = 0x4, scoped, tag = 'scoped memory for tpu_custom_call.1']
    #allocation5 [shape = 'u8[16384]{0}', space=vmem, size = 0x4000, scoped, tag = 'input window, operand 1, single buffered']
    #allocation6 [shape = 's32[1]{0}', space=sflag, size = 0x4, scoped, tag = 'scoped memory for tpu_custom_call.1']
    #allocation7 [shape = 'u8[2048]{0}', space=vmem, size = 0x800, scoped, tag = 'output window, operand 0, single buffered']
    %10 = vsyncpa [#allocation3], 0
    %11 = vsyncpa [#allocation6], 0
    %12 = vsyncpa [#allocation4], 0
    // Predicated region
    $region2: #{tpu_custom_call.1} parent=1 // pred_check
      _
    $region3: #{tpu_custom_call.1} parent=1 // pred_check_branch
      %14 = sbr.rel (0) target = $region5
    $region4: #{tpu_custom_call.1} parent=1 // pred_region
      %s16 = ssub.s32 256, 256
      %17 = vsyncadd [#allocation3], %s16
      %s18 = sshll.u32 [#allocation2], 4
      %s19 = int_to_ptr.vmem [resolvable:$true] %s18
      %24 = dma.hbm_to_vmem [thread:$0]  %s0, 256, %s19, [#allocation3], 128, 128, 8
    $region5: #{tpu_custom_call.1} parent=1 // pred_fallthru
      _
    // Predicated region
    $region6: #{tpu_custom_call.1} parent=1 // pred_check
      _
    $region7: #{tpu_custom_call.1} parent=1 // pred_check_branch
      %26 = sbr.rel (0) target = $region9
    $region8: #{tpu_custom_call.1} parent=1 // pred_region
      %s28 = ssub.s32 512, 512
      %29 = vsyncadd [#allocation6], %s28
      %s30 = sshll.u32 [#allocation5], 4
      %s31 = int_to_ptr.vmem [resolvable:$true] %s30
      %36 = dma.hbm_to_vmem [thread:$0]  %s1, 512, %s31, [#allocation6], 128, 128, 8
    $region9: #{tpu_custom_call.1} parent=1 // pred_fallthru
      _
    // Predicated region
    $region10: #{tpu_custom_call.1} parent=1 // pred_check
      _
    $region11: #{tpu_custom_call.1} parent=1 // pred_check_branch
      %38 = sbr.rel (0) target = $region13
    $region12: #{tpu_custom_call.1} parent=1 // pred_region
      _
    $region13: #{tpu_custom_call.1} parent=1 // pred_fallthru
      _
    // Predicated region
    $region14: #{tpu_custom_call.1} parent=1 // pred_check
      _
    $region15: #{tpu_custom_call.1} parent=1 // pred_check_branch
      %40 = sbr.rel (0) target = $region17
    $region16: #{tpu_custom_call.1} parent=1 // pred_region
      _
    $region17: #{tpu_custom_call.1} parent=1 // pred_fallthru
      _
    // Predicated region
    $region18: #{tpu_custom_call.1} parent=1 // pred_check
      _
    $region19: #{tpu_custom_call.1} parent=1 // pred_check_branch
      %42 = sbr.rel (0) target = $region21
    $region20: #{tpu_custom_call.1} parent=1 // pred_region
      _
    $region21: #{tpu_custom_call.1} parent=1 // pred_fallthru
      _
    // Predicated region
    $region22: #{tpu_custom_call.1} parent=1 // pred_check
      _
    $region23: #{tpu_custom_call.1} parent=1 // pred_check_branch
      %44 = sbr.rel (0) target = $region25
    $region24: #{tpu_custom_call.1} parent=1 // pred_region
      %45 = dma.done [#allocation3], 256
    $region25: #{tpu_custom_call.1} parent=1 // pred_fallthru
      _
    // Predicated region
    $region26: #{tpu_custom_call.1} parent=1 // pred_check
      _
    $region27: #{tpu_custom_call.1} parent=1 // pred_check_branch
      %47 = sbr.rel (0) target = $region29
    $region28: #{tpu_custom_call.1} parent=1 // pred_region
      %48 = dma.done [#allocation6], 512
    $region29: #{tpu_custom_call.1} parent=1 // pred_fallthru
      _
    %v50 = vld [vmem:[#allocation2] sm:$0xff]
    %v51 = vld [vmem:[#allocation2 + $0x8] sm:$0xff]
    %v52 = vpack.c.bf16 %v51, %v50
    %v53 = vld [vmem:[#allocation5] sm:$0xff]
    %v54 = vld [vmem:[#allocation5 + $0x8] sm:$0xff]
    %v55 = vld [vmem:[#allocation5 + $0x10] sm:$0xff]
    %v56 = vld [vmem:[#allocation5 + $0x18] sm:$0xff]
    %v57 = vld [vmem:[%s2] sm:$0x3]
    %v59 = vlaneseq
    %v60 = vshrl.u32 %v59, 7
    %v61 = vsub.s32 0, %v60
    %v62 = vrot.slane %v57, %v61
    %v63 = vlaneseq
    %v64 = vshrl.u32 %v63, 7
    %v65 = vsub.s32 1, %v64
    %v66 = vrot.slane %v57, %v65
    %v73 = vunpack.c.l.b16 %v53
    %v74 = vunpack.c.h.b16 %v53
    %v75 = vunpack.c.l.b16 %v54
    %v76 = vunpack.c.h.b16 %v54
    %v77 = vunpack.c.l.b16 %v55
    %v78 = vunpack.c.h.b16 %v55
    %v79 = vunpack.c.l.b16 %v56
    %v80 = vunpack.c.h.b16 %v56
    %v81 = vpack.c.b16 %v75, %v73
    %v82 = vpack.c.b16 %v76, %v74
    %v83 = vpack.c.b16 %v79, %v77
    %v84 = vpack.c.b16 %v80, %v78
    %vm89 = vcmask 261120
    %v91 = vsel %vm89, %v52, 0
    %93 = vmatprep.subr.bf16.mxu0 0
    %94 = vmatpush1.bf16.msra.mxu0 0
    %95 = vmatprep.subr.bf16.mxu0 0
    %96 = vmatpush1.bf16.msra.mxu0 0
    %97 = vmatprep.subr.bf16.mxu0 0
    %98 = vmatpush1.bf16.msra.mxu0 0
    %99 = vmatprep.subr.bf16.mxu0 0
    %100 = vmatpush1.bf16.msra.mxu0 0
    %101 = vmatprep.subr.bf16.mxu0 0
    %102 = vmatpush1.bf16.msra.mxu0 0
    %103 = vmatprep.subr.bf16.mxu0 0
    %104 = vmatpush1.bf16.msra.mxu0 0
    %105 = vmatprep.subr.bf16.mxu0 %v84
    %106 = vmatpush1.bf16.msra.mxu0 %v83
    %107 = vmatprep.subr.bf16.mxu0 %v82
    %108 = vmatpush1.bf16.msra.mxu0 %v81
    %109 = vmatprep.subr.bf16.mxu0 0
    %110 = vmatpush2.bf16.msra.mxu0 0
    %111 = vmatprep.subr.bf16.mxu0 0
    %112 = vmatpush2.bf16.msra.mxu0 0
    %113 = vmatprep.subr.bf16.mxu0 0
    %114 = vmatpush2.bf16.msra.mxu0 0
    %115 = vmatprep.subr.bf16.mxu0 0
    %116 = vmatpush2.bf16.msra.mxu0 0
    %117 = vmatprep.subr.bf16.mxu0 0
    %118 = vmatpush2.bf16.msra.mxu0 0
    %119 = vmatprep.subr.bf16.mxu0 0
    %120 = vmatpush2.bf16.msra.mxu0 0
    %121 = vmatprep.subr.bf16.mxu0 0
    %122 = vmatpush2.bf16.msra.mxu0 0
    %123 = vmatprep.subr.bf16.mxu0 0
    %124 = vmatpush2.bf16.msra.mxu0 0
    %125 = vmatprep.mubr.bf16.mxu0 0
    %126 = vmatmul.mubr.bf16.gmra.mxu0 %v91
    %v127 = vpop.f32.mrf.mxu0
    %v128 = vadd.f32 %v62, %v127
    %v129 = vpop.f32.mrf.mxu0
    %v130 = vadd.f32 %v66, %v129
    %v131 = vpop.f32.mrf.mxu0
    %v132 = vadd.f32 %v62, %v131
    %v133 = vpop.f32.mrf.mxu0
    %v134 = vadd.f32 %v66, %v133
    %135 = vdwg.mxu0
    %v136 = vmax.f32 %v128, 0.0
    %v137 = vmax.f32 %v130, 0.0
    %v138 = vmax.f32 %v132, 0.0
    %v139 = vmax.f32 %v134, 0.0
    %v140 = vld [vmem:[%s3] sm:$0xf]
    %v141 = vpack.c.bf16 %v138, %v136
    %v142 = vpack.c.bf16 %v139, %v137
    %v143 = vld [vmem:[%s4] sm:$0xf]
    %145 = vset.pattern.permute.xlu0 0
    %146 = vperm.xlu0 %145, %v143
    %v147 = vpop.permute.xlu0 %146
    %v151 = vunpack.c.l.s4 1983009808
    %v152 = vunpack.c.0.s8 %v151
    %v153 = vlaneseq
    %v154 = vshrl.u32 %v153, 7
    %v155 = vsub.s32 %v152, %v154
    %v156 = vrot.slane %v140, %v155
    %v157 = vcombine.high %v156, %v156
    %160 = vmatprep.subr.bf16.mxu0 0
    %161 = vmatpush1.bf16.xpose.msra.mxu0 0
    %162 = vmatprep.subr.bf16.mxu0 0
    %163 = vmatpush1.bf16.xpose.msra.mxu0 0
    %164 = vmatprep.subr.bf16.mxu0 0
    %165 = vmatpush1.bf16.xpose.msra.mxu0 0
    %166 = vmatprep.subr.bf16.mxu0 0
    %167 = vmatpush1.bf16.xpose.msra.mxu0 0
    %168 = vmatprep.subr.bf16.mxu0 0
    %169 = vmatpush1.bf16.xpose.msra.mxu0 0
    %170 = vmatprep.subr.bf16.mxu0 0
    %171 = vmatpush1.bf16.xpose.msra.mxu0 0
    %172 = vmatprep.subr.bf16.mxu0 0
    %173 = vmatpush1.bf16.xpose.msra.mxu0 0
    %174 = vmatprep.subr.bf16.mxu0 %v142
    %175 = vmatpush1.bf16.xpose.msra.mxu0 %v141
    %176 = vmatprep.subr.bf16.mxu0 0
    %177 = vmatpush2.bf16.xpose.msra.mxu0 0
    %178 = vmatprep.subr.bf16.mxu0 0
    %179 = vmatpush2.bf16.xpose.msra.mxu0 0
    %180 = vmatprep.subr.bf16.mxu0 0
    %181 = vmatpush2.bf16.xpose.msra.mxu0 0
    %182 = vmatprep.subr.bf16.mxu0 0
    %183 = vmatpush2.bf16.xpose.msra.mxu0 0
    %184 = vmatprep.subr.bf16.mxu0 0
    %185 = vmatpush2.bf16.xpose.msra.mxu0 0
    %186 = vmatprep.subr.bf16.mxu0 0
    %187 = vmatpush2.bf16.xpose.msra.mxu0 0
    %188 = vmatprep.subr.bf16.mxu0 0
    %189 = vmatpush2.bf16.xpose.msra.mxu0 0
    %190 = vmatprep.subr.bf16.mxu0 0
    %191 = vmatpush2.bf16.xpose.msra.mxu0 0
    %192 = vmatprep.mubr.bf16.mxu0 %v157
    %193 = vmatmul.mubr.bf16.gmra.mxu0 %v156
    %v194 = vpop.f32.mrf.mxu0
    %v195 = vadd.f32 %v147, %v194
    %v196 = vpop.f32.mrf.mxu0
    %v197 = vpop.f32.mrf.mxu0
    %v198 = vpop.f32.mrf.mxu0
    %199 = vdwg.mxu0
    %vm200 = vcmask 125952
    %201 = vst.msk [vmem:[#allocation7] sm:$0xf] %vm200, %v195
    // Predicated region
    $region30: #{tpu_custom_call.1} parent=1 // pred_check
      _
    $region31: #{tpu_custom_call.1} parent=1 // pred_check_branch
      %203 = sbr.rel (0) target = $region33
    $region32: #{tpu_custom_call.1} parent=1 // pred_region
      %s205 = ssub.s32 64, 64
      %206 = vsyncadd [#allocation4], %s205
      %s208 = sshll.u32 [#allocation7], 4
      %s209 = int_to_ptr.vmem [resolvable:$true] %s208
      %211 = dma.vmem_to_hbm [thread:$0]  %s209, 64, %s5, [#allocation4]
    $region33: #{tpu_custom_call.1} parent=1 // pred_fallthru
      _
    // Predicated region
    $region34: #{tpu_custom_call.1} parent=1 // pred_check
      _
    $region35: #{tpu_custom_call.1} parent=1 // pred_check_branch
      %213 = sbr.rel (0) target = $region37
    $region36: #{tpu_custom_call.1} parent=1 // pred_region
      %214 = dma.done [#allocation4], 64
    $region37: #{tpu_custom_call.1} parent=1 // pred_fallthru
      _
    %215 = vsyncpa [#allocation3], 1
    %216 = vsyncpa [#allocation6], 1
    %217 = vsyncpa [#allocation4], 1

</llo_original>
